<compile_context>
chip_gen: v7x
topology: tpu7x:2x2x1
jax: 0.10.0
libtpu: 0.0.40
codegen_flags: <defaults>
</compile_context>

<pallas_src>
import jax
import jax.numpy as jnp
from jax.experimental import pallas as pl
from jax.experimental.pallas import tpu as pltpu

_LANES = 128
_SUBLANES = 8


def qars_loss(pred: jax.Array, target: jax.Array, *,
              tile_rows: int = 4096, num_parts: int = 2) -> jax.Array:
    assert pred.shape == target.shape, "pred/target shape mismatch"
    n = pred.size

    # ---- dtype-aware sublane alignment (f32 -> 8, bf16 -> 16, int8 -> 32) ---
    min_itemsize = min(jnp.dtype(pred.dtype).itemsize,
                       jnp.dtype(target.dtype).itemsize)
    sub_align = _SUBLANES * max(1, 4 // max(1, min_itemsize))

    # ---- flatten to a lane-dense (rows_p, 128) slab; pad only if needed ----
    rows = pl.cdiv(n, _LANES)
    rows_p = ((rows + sub_align - 1) // sub_align) * sub_align
    padded_n = rows_p * _LANES
    p_flat = pred.reshape(-1)
    t_flat = target.reshape(-1)
    if padded_n != n:
        # (0 - 0)^2 contributes nothing; pad fires only on ragged inputs.
        p_flat = jnp.pad(p_flat, (0, padded_n - n))
        t_flat = jnp.pad(t_flat, (0, padded_n - n))
    p2 = p_flat.reshape(rows_p, _LANES)
    t2 = t_flat.reshape(rows_p, _LANES)

    # ---- tiling / grid selection -------------------------------------------
    tr = min(tile_rows, 8192, rows_p)            # 8192-row cap keeps VMEM safe
    tr = max(sub_align, (tr // sub_align) * sub_align)
    num_tiles = pl.cdiv(rows_p, tr)
    parts = max(1, min(num_parts, num_tiles))
    steps = pl.cdiv(num_tiles, parts)
    # Mask is needed if the last block is partial or a part revisits a tile.
    needs_mask = (parts * steps != num_tiles) or (num_tiles * tr != rows_p)

    def kernel(p_ref, t_ref, o_ref, acc_ref):
        part = pl.program_id(0)
        step = pl.program_id(1)

        @pl.when(step == 0)
        def _():
            acc_ref[...] = jnp.zeros_like(acc_ref)

        diff = t_ref[...].astype(jnp.float32) - p_ref[...].astype(jnp.float32)
        sq = diff * diff
        if needs_mask:
            tile_id = part * steps + step           # unclamped: zeroes dup tiles
            row = jax.lax.broadcasted_iota(jnp.int32, (tr, _LANES), 0)
            sq = jnp.where(tile_id * tr + row < rows_p, sq, 0.0)
        # Elementwise (VPU-only) accumulation into an (8,128) vreg-shaped tile;
        # no cross-lane reduction in the steady state.
        acc_ref[...] += jnp.sum(sq.reshape(tr // _SUBLANES, _SUBLANES, _LANES),
                                axis=0)

        @pl.when(step == steps - 1)
        def _():
            o_ref[...] = acc_ref[...].reshape(o_ref.shape).astype(o_ref.dtype)

    def in_map(part, step):
        tile_id = part * steps + step
        if needs_mask:
            tile_id = jnp.minimum(tile_id, num_tiles - 1)  # clamp duplicate tile
        return (tile_id, 0)

    itemsize = max(jnp.dtype(pred.dtype).itemsize,
                   jnp.dtype(target.dtype).itemsize)
    block_bytes = tr * _LANES * itemsize
    # 2 inputs x 2 pipeline buffers + slack; bounded so it fits every chip.
    vmem_limit = int(min(max(4 * block_bytes + (4 << 20), 16 << 20), 48 << 20))

    partials = pl.pallas_call(
        kernel,
        out_shape=jax.ShapeDtypeStruct((parts, _SUBLANES, _LANES), jnp.float32),
        grid_spec=pltpu.PrefetchScalarGridSpec(
            num_scalar_prefetch=0,
            grid=(parts, steps),
            in_specs=[
                pl.BlockSpec((tr, _LANES), in_map),
                pl.BlockSpec((tr, _LANES), in_map),
            ],
            out_specs=pl.BlockSpec((1, _SUBLANES, _LANES),
                                   lambda part, step: (part, 0, 0)),
            scratch_shapes=[pltpu.VMEM((_SUBLANES, _LANES), jnp.float32)],
        ),
        compiler_params=pltpu.CompilerParams(
            dimension_semantics=("parallel", "arbitrary"),
            vmem_limit_bytes=vmem_limit,
        ),
    )(p2, t2)

    # Tiny (parts, 8, 128) final reduction done by XLA.
    return jnp.sum(partials)


if __name__ == "__main__":
    key = jax.random.PRNGKey(0)
    k1, k2, k3, k4, k5, k6 = jax.random.split(key, 6)

    # 1) Small NCHW shape consistent with a typical QARSLoss call site.
    pred = jax.random.normal(k1, (2, 4, 16, 16), dtype=jnp.float32)
    target = jax.random.normal(k2, (2, 4, 16, 16), dtype=jnp.float32)
    loss = qars_loss(pred, target)
    jax.block_until_ready(loss)
    ref = jnp.sum((target - pred) ** 2)
    assert jnp.allclose(loss, ref, rtol=1e-4, atol=1e-4), (loss, ref)

    # 2) Ragged row count -> exercises the in-kernel tail mask + 2-part split.
    p2_ = jax.random.normal(k3, (2, 4, 50, 64), dtype=jnp.float32)   # 25600 elems
    t2_ = jax.random.normal(k4, (2, 4, 50, 64), dtype=jnp.float32)
    l2 = qars_loss(p2_, t2_, tile_rows=64)
    jax.block_until_ready(l2)
    r2 = jnp.sum((t2_ - p2_) ** 2)
    assert jnp.allclose(l2, r2, rtol=1e-4, atol=1e-4), (l2, r2)

    # 3) Odd tile count (duplicate-tile clamp) + bf16 inputs (native-dtype DMA,
    #    16-sublane alignment).
    p3_ = jax.random.normal(k5, (2, 4, 40, 64), dtype=jnp.bfloat16)  # 20480 elems
    t3_ = jax.random.normal(k6, (2, 4, 40, 64), dtype=jnp.bfloat16)
    l3 = qars_loss(p3_, t3_, tile_rows=64)
    jax.block_until_ready(l3)
    r3 = jnp.sum((t3_.astype(jnp.float32) - p3_.astype(jnp.float32)) ** 2)
    assert jnp.allclose(l3, r3, rtol=1e-4, atol=1e-4), (l3, r3)

    print("KERNEL_OK")
</pallas_src>

<mosaic_0001>
module attributes {stable_mosaic.version = 11 : i64} {
  func.func @kernel(%arg0: i32, %arg1: i32, %arg2: memref<16x128xf32, #tpu.memory_space<vmem>>, %arg3: memref<16x128xf32, #tpu.memory_space<vmem>>, %arg4: memref<1x8x128xf32, #tpu.memory_space<vmem>>, %arg5: memref<8x128xf32, #tpu.memory_space<vmem>>) attributes {dimension_semantics = [#tpu.dimension_semantics<parallel>, #tpu.dimension_semantics<arbitrary>], iteration_bounds = array<i64: 1, 1>, scalar_prefetch = 0 : i64, scratch_operands = 1 : i64, tpu.core_type = #tpu.core_type<tc>, window_params = [{transform_indices = @transform_0, window_bounds = array<i64: 16, 128>}, {transform_indices = @transform_1, window_bounds = array<i64: 16, 128>}, {transform_indices = @transform_2, window_bounds = array<i64: 1, 8, 128>}]} {
    %c0_i32 = arith.constant 0 : i32
    %0 = arith.cmpi eq, %arg1, %c0_i32 : i32
    %1 = arith.extui %0 : i1 to i32
    %c0_i32_0 = arith.constant 0 : i32
    %2 = arith.cmpi ne, %1, %c0_i32_0 : i32
    scf.if %2 {
      %cst_10 = arith.constant 0.000000e+00 : f32
      %15 = vector.broadcast %cst_10 : f32 to vector<8x128xf32>
      %c0_11 = arith.constant 0 : index
      %c0_12 = arith.constant 0 : index
      %16 = vector.load %arg5[%c0_11, %c0_12] : memref<8x128xf32, #tpu.memory_space<vmem>>, vector<8x128xf32>
      tpu.vector_store %arg5[%c0_11, %c0_12], %15 {strides = array<i32>} : memref<8x128xf32, #tpu.memory_space<vmem>>, vector<8x128xf32>,
    } else {
    }
    %c0 = arith.constant 0 : index
    %c0_1 = arith.constant 0 : index
    %3 = vector.load %arg3[%c0, %c0_1] : memref<16x128xf32, #tpu.memory_space<vmem>>, vector<16x128xf32>
    %c0_2 = arith.constant 0 : index
    %c0_3 = arith.constant 0 : index
    %4 = vector.load %arg2[%c0_2, %c0_3] : memref<16x128xf32, #tpu.memory_space<vmem>>, vector<16x128xf32>
    %5 = arith.subf %3, %4 : vector<16x128xf32>
    %6 = arith.mulf %5, %5 : vector<16x128xf32>
    %c0_4 = arith.constant 0 : index
    %c0_5 = arith.constant 0 : index
    %7 = vector.load %arg5[%c0_4, %c0_5] : memref<8x128xf32, #tpu.memory_space<vmem>>, vector<8x128xf32>
    %8 = vector.shape_cast %6 : vector<16x128xf32> to vector<2x8x128xf32>
    %cst = arith.constant dense<0.000000e+00> : vector<8x128xf32>
    %9 = vector.multi_reduction <add>, %8, %cst [0] : vector<2x8x128xf32> to vector<8x128xf32>
    %10 = arith.addf %7, %9 : vector<8x128xf32>
    %c0_6 = arith.constant 0 : index
    %c0_7 = arith.constant 0 : index
    %11 = vector.load %arg5[%c0_6, %c0_7] : memref<8x128xf32, #tpu.memory_space<vmem>>, vector<8x128xf32>
    tpu.vector_store %arg5[%c0_6, %c0_7], %10 {strides = array<i32>} : memref<8x128xf32, #tpu.memory_space<vmem>>, vector<8x128xf32>,
    %c0_i32_8 = arith.constant 0 : i32
    %12 = arith.cmpi eq, %arg1, %c0_i32_8 : i32
    %13 = arith.extui %12 : i1 to i32
    %c0_i32_9 = arith.constant 0 : i32
    %14 = arith.cmpi ne, %13, %c0_i32_9 : i32
    scf.if %14 {
      %c0_10 = arith.constant 0 : index
      %c0_11 = arith.constant 0 : index
      %15 = vector.load %arg5[%c0_10, %c0_11] : memref<8x128xf32, #tpu.memory_space<vmem>>, vector<8x128xf32>
      %16 = vector.shape_cast %15 : vector<8x128xf32> to vector<1x8x128xf32>
      %c0_12 = arith.constant 0 : index
      %c0_13 = arith.constant 0 : index
      %c0_14 = arith.constant 0 : index
      %17 = vector.load %arg4[%c0_12, %c0_13, %c0_14] : memref<1x8x128xf32, #tpu.memory_space<vmem>>, vector<1x8x128xf32>
      tpu.vector_store %arg4[%c0_12, %c0_13, %c0_14], %16 {strides = array<i32>} : memref<1x8x128xf32, #tpu.memory_space<vmem>>, vector<1x8x128xf32>,
    } else {
    }
    return
  }
  func.func @transform_0(%arg0: i32, %arg1: i32) -> (i32, i32) {
    %c1_i32 = arith.constant 1 : i32
    %0 = arith.muli %arg0, %c1_i32 : i32
    %1 = arith.addi %0, %arg1 : i32
    %c0_i32 = arith.constant 0 : i32
    %c0_i32_0 = arith.constant 0 : i32
    return %1, %c0_i32 : i32, i32
  }
  func.func @transform_1(%arg0: i32, %arg1: i32) -> (i32, i32) {
    %c1_i32 = arith.constant 1 : i32
    %0 = arith.muli %arg0, %c1_i32 : i32
    %1 = arith.addi %0, %arg1 : i32
    %c0_i32 = arith.constant 0 : i32
    %c0_i32_0 = arith.constant 0 : i32
    return %1, %c0_i32 : i32, i32
  }
  func.func @transform_2(%arg0: i32, %arg1: i32) -> (i32, i32, i32) {
    %c0_i32 = arith.constant 0 : i32
    %c0_i32_0 = arith.constant 0 : i32
    %c0_i32_1 = arith.constant 0 : i32
    return %arg0, %c0_i32, %c0_i32_0 : i32, i32, i32
  }
}

</mosaic_0001>

<llo_original>
// kernel: tpu_custom_call.1
$region0: #{tpu_custom_call.1}
  #allocation0 [shape = 'u32[]', space=smem, size = 0x4, offset = 0x4, fixed_abs, tag = 'smem constant byte address 0x4 - core index']
  #allocation1 [shape = 'u32[144,128]{1,0:T(1,128)}', space=vmem, size = 0x12000, scoped, tag = 'internal scratch']
  #allocation2 [shape = 'f32[8,128]{1,0:T(8,128)}', space=vmem, size = 0x1000, scoped, tag = 'scratch operand']
  %s0 = inlined_call_operand.hbm [shape: f32[16,128], index: 0, kind: input, shape index: {}]
  %s1 = inlined_call_operand.hbm [shape: f32[16,128], index: 1, kind: input, shape index: {}]
  %s2 = inlined_call_operand.hbm [shape: f32[1,8,128], index: 2, kind: output, shape index: {}]
  %s3 = sld [smem:[#allocation0]]
  $region34: #{tpu_custom_call.1} parent=0
    _
  %s5 = ssub.s32 1, %s3
  %s6 = scalar_select 0, %s5, %s3
  $region1: #{tpu_custom_call.1} parent=0
    #allocation3 [shape = 'u8[8192]{0}', space=vmem, size = 0x2000, scoped, tag = 'input window, operand 0, single buffered']
    #allocation4 [shape = 's32[1]{0}', space=sflag, size = 0x4, scoped, tag = 'scoped memory for tpu_custom_call.1']
    #allocation5 [shape = 's32[1]{0}', space=sflag, size = 0x4, scoped, tag = 'scoped memory for tpu_custom_call.1']
    #allocation6 [shape = 'u8[8192]{0}', space=vmem, size = 0x2000, scoped, tag = 'input window, operand 1, single buffered']
    #allocation7 [shape = 's32[1]{0}', space=sflag, size = 0x4, scoped, tag = 'scoped memory for tpu_custom_call.1']
    #allocation8 [shape = 'u8[4096]{0}', space=vmem, size = 0x1000, scoped, tag = 'output window, operand 0, single buffered']
    %7 = vsyncpa [#allocation4], 0
    %8 = vsyncpa [#allocation7], 0
    %9 = vsyncpa [#allocation5], 0
    // Predicated region
    $region2: #{tpu_custom_call.1} parent=1 // pred_check
      _
    $region3: #{tpu_custom_call.1} parent=1 // pred_check_branch
      %11 = sbr.rel (0) target = $region5
    $region4: #{tpu_custom_call.1} parent=1 // pred_region
      %s12 = sadd.s32 0, 0
      %s13 = smul.u32 2, %s12
      %s15 = ssub.s32 256, 256
      %16 = vsyncadd [#allocation4], %s15
      %s17 = smul.addr %s13, 128
      %s18 = scalar_lea.hbm %s0, %s17
      %s19 = sshll.u32 [#allocation3], 4
      %s20 = int_to_ptr.vmem [resolvable:$true] %s19
      %25 = dma.hbm_to_vmem [thread:$0]  %s18, 256, %s20, [#allocation4], 128, 128, 8
    $region5: #{tpu_custom_call.1} parent=1 // pred_fallthru
      _
    // Predicated region
    $region6: #{tpu_custom_call.1} parent=1 // pred_check
      _
    $region7: #{tpu_custom_call.1} parent=1 // pred_check_branch
      %27 = sbr.rel (0) target = $region9
    $region8: #{tpu_custom_call.1} parent=1 // pred_region
      %s28 = sadd.s32 0, 0
      %s29 = smul.u32 2, %s28
      %s31 = ssub.s32 256, 256
      %32 = vsyncadd [#allocation7], %s31
      %s33 = smul.addr %s29, 128
      %s34 = scalar_lea.hbm %s1, %s33
      %s35 = sshll.u32 [#allocation6], 4
      %s36 = int_to_ptr.vmem [resolvable:$true] %s35
      %41 = dma.hbm_to_vmem [thread:$0]  %s34, 256, %s36, [#allocation7], 128, 128, 8
    $region9: #{tpu_custom_call.1} parent=1 // pred_fallthru
      _
    // Predicated region
    $region10: #{tpu_custom_call.1} parent=1 // pred_check
      _
    $region11: #{tpu_custom_call.1} parent=1 // pred_check_branch
      %43 = sbr.rel (0) target = $region13
    $region12: #{tpu_custom_call.1} parent=1 // pred_region
      %44 = dma.done [#allocation4], 256
    $region13: #{tpu_custom_call.1} parent=1 // pred_fallthru
      _
    // Predicated region
    $region14: #{tpu_custom_call.1} parent=1 // pred_check
      _
    $region15: #{tpu_custom_call.1} parent=1 // pred_check_branch
      %46 = sbr.rel (0) target = $region17
    $region16: #{tpu_custom_call.1} parent=1 // pred_region
      %47 = dma.done [#allocation7], 256
    $region17: #{tpu_custom_call.1} parent=1 // pred_fallthru
      _
    %s48 = sadd.s32 0, 0
    %s49 = smul.u32 2, %s48
    %s50 = sadd.s32 0, 0
    %s51 = smul.u32 2, %s50
    %p52 = scmp.eq.s32.totalorder 0, 0
    // Predicated region
    $region18: #{tpu_custom_call.1} parent=1 // pred_check
      %p53 = pneg %p52
    $region19: #{tpu_custom_call.1} parent=1 // pred_check_branch
      %55 = sbr.rel (%p53) target = $region21
    $region20: #{tpu_custom_call.1} parent=1 // pred_region
      %56 = vst [vmem:[#allocation2] sm:$0xff] 0.0
    $region21: #{tpu_custom_call.1} parent=1 // pred_fallthru
      _
    %v57 = vld [vmem:[#allocation6] sm:$0xff]
    %v58 = vld [vmem:[#allocation6 + $0x8] sm:$0xff]
    %v59 = vld [vmem:[#allocation3] sm:$0xff]
    %v60 = vld [vmem:[#allocation3 + $0x8] sm:$0xff]
    %v61 = vsub.f32 %v57, %v59
    %v62 = vsub.f32 %v58, %v60
    %v63 = vmul.f32 %v61, %v61
    %v64 = vmul.f32 %v62, %v62
    %v65 = vld [vmem:[#allocation2] sm:$0xff]
    %v66 = vadd.f32 %v63, %v64
    %v67 = vadd.f32 %v65, %v66
    %68 = vst [vmem:[#allocation2] sm:$0xff] %v67
    // Predicated region
    $region22: #{tpu_custom_call.1} parent=1 // pred_check
      %p69 = pneg %p52
    $region23: #{tpu_custom_call.1} parent=1 // pred_check_branch
      %71 = sbr.rel (%p69) target = $region25
    $region24: #{tpu_custom_call.1} parent=1 // pred_region
      %v72 = vld [vmem:[#allocation2] sm:$0xff]
      %73 = vst [vmem:[#allocation8] sm:$0xff] %v72
    $region25: #{tpu_custom_call.1} parent=1 // pred_fallthru
      _
    // Predicated region
    $region26: #{tpu_custom_call.1} parent=1 // pred_check
      _
    $region27: #{tpu_custom_call.1} parent=1 // pred_check_branch
      %75 = sbr.rel (0) target = $region29
    $region28: #{tpu_custom_call.1} parent=1 // pred_region
      %s77 = ssub.s32 128, 128
      %78 = vsyncadd [#allocation5], %s77
      %s80 = sshll.u32 [#allocation8], 4
      %s81 = int_to_ptr.vmem [resolvable:$true] %s80
      %83 = dma.vmem_to_hbm [thread:$0]  %s81, 128, %s2, [#allocation5]
    $region29: #{tpu_custom_call.1} parent=1 // pred_fallthru
      _
    // Predicated region
    $region30: #{tpu_custom_call.1} parent=1 // pred_check
      _
    $region31: #{tpu_custom_call.1} parent=1 // pred_check_branch
      %85 = sbr.rel (0) target = $region33
    $region32: #{tpu_custom_call.1} parent=1 // pred_region
      %86 = dma.done [#allocation5], 128
    $region33: #{tpu_custom_call.1} parent=1 // pred_fallthru
      _
    %87 = vsyncpa [#allocation4], 1
    %88 = vsyncpa [#allocation7], 1
    %89 = vsyncpa [#allocation5], 1

</llo_original>
